<compile_context>
chip_gen: v7x
topology: tpu7x:2x2x1
jax: 0.10.0
libtpu: 0.0.40
codegen_flags: <defaults>
</compile_context>

<pallas_src>
import functools

import jax
import jax.numpy as jnp
from jax.experimental import pallas as pl
from jax.experimental.pallas import tpu as pltpu

# ----------------------------- config ---------------------------------------
SIGMA = 0.1
NOISE_STD = 0.1
NUM_INPUT_FRAMES = 2     # config['num_input_frames']  (> 1)
C_IN = 3                 # observation channels
C_LAT = 8                # latent channels produced by the "autoencoder"
STATE_SIZE = 8           # config['vector_field_regressor']['state_size']
HIDDEN = 32              # hidden width of the synthetic regressor
FUNC = "f_mse"


# ----------------------------- fused kernel ---------------------------------
def _fused_kernel(t_ref, x_ref, nz_ref, we_ref, be_ref, w1_ref, b1_ref,
                  w2_ref, b2_ref, rec_ref, tgt_ref,
                  *, sigma, noise_std, state_size, c_lat, nc):
    """One grid step = one batch element x one spatial row tile.

    All activations are (channels, spatial_tile): lane axis = spatial tile
    (multiple of 128) -> lane-dense loads/stores everywhere.
    """
    i = pl.program_id(0)                       # batch index
    t = t_ref[i]                               # per-batch timestamp, f32 in SMEM
    one_m_sigma = 1.0 - sigma
    denom = 1.0 - one_m_sigma * t
    inv_denom = 1.0 / denom                    # one scalar reciprocal

    # --- synthetic autoencoder encode: block-diagonal 1x1 conv + tanh -------
    x = x_ref[0].astype(jnp.float32)           # ((nif+1)*C_in, TILE)
    lat = jnp.tanh(
        jnp.dot(we_ref[...], x, preferred_element_type=jnp.float32) + be_ref[...])
    # lat: ((nif+1)*C_LAT, TILE), channels ordered frame-major.

    pos_start = lat[:nc, :]                    # frames 0..nif-1
    pos_end = lat[c_lat:, :]                   # frames 1..nif

    # --- flow matching -------------------------------------------------------
    pos_interp = denom * pos_start + t * pos_end
    noisy = pos_interp + nz_ref[0].astype(jnp.float32) * noise_std

    # target vectors: only the last `state_size` channels (slice before math).
    lo = nc - state_size
    tgt_ref[0] = (pos_end[lo:, :] - one_m_sigma * pos_interp[lo:, :]) * inv_denom

    # --- synthetic vector_field_regressor: fused 2-layer MLP on the MXU -----
    h = jnp.dot(w1_ref[...], noisy, preferred_element_type=jnp.float32) + b1_ref[...]
    h = jax.nn.gelu(h, approximate=True)
    rec_ref[0] = (jnp.dot(w2_ref[...], h, preferred_element_type=jnp.float32)
                  + b2_ref[...])


def _pick_spatial_tile(hw, cap=2048):
    """Largest multiple of 128 dividing hw (capped); fall back to full dim."""
    if hw % 128 != 0:
        return hw                              # full-dim block is always legal
    best = 128
    d = 256
    while d <= min(hw, cap):
        if hw % d == 0:
            best = d
        d += 128
    return best


def fused_forward(timestamps, x, noise, params, *, sigma, noise_std,
                  state_size, c_lat):
    """x: (b, (nif+1)*C_in, H*W)  noise: (b, nif*C_LAT, H*W)  timestamps: (b,)."""
    b, cf, hw = x.shape
    nc = noise.shape[1]
    tile = _pick_spatial_tile(hw)
    n_sp = hw // tile

    kern = functools.partial(_fused_kernel, sigma=sigma, noise_std=noise_std,
                             state_size=state_size, c_lat=c_lat, nc=nc)

    def wspec(arr):
        return pl.BlockSpec(arr.shape, lambda i, j: (0, 0))

    act_spec = lambda c: pl.BlockSpec((1, c, tile), lambda i, j: (i, 0, j))

    rec, tgt = pl.pallas_call(
        kern,
        out_shape=(
            jax.ShapeDtypeStruct((b, state_size, hw), jnp.float32),  # reconstructed
            jax.ShapeDtypeStruct((b, state_size, hw), jnp.float32),  # target
        ),
        grid=(b, n_sp),
        in_specs=[
            pl.BlockSpec(memory_space=pltpu.MemorySpace.SMEM),       # timestamps
            act_spec(cf),                                            # frame pixels
            act_spec(nc),                                            # noise
            wspec(params["we_t"]), wspec(params["be"]),
            wspec(params["w1_t"]), wspec(params["b1"]),
            wspec(params["w2_t"]), wspec(params["b2"]),
        ],
        out_specs=(
            pl.BlockSpec((1, state_size, tile), lambda i, j: (i, 0, j)),
            pl.BlockSpec((1, state_size, tile), lambda i, j: (i, 0, j)),
        ),
        compiler_params=pltpu.CompilerParams(
            dimension_semantics=("parallel", "parallel")),
    )(timestamps, x, noise,
      params["we_t"], params["be"],
      params["w1_t"], params["b1"],
      params["w2_t"], params["b2"])
    return rec, tgt


# ----------------------------- model wrapper --------------------------------
def model_forward(observations, params, key):
    """observations: [b, num_observations, num_channels, H, W] (NCHW frames)."""
    b, num_obs, c_in, h, w = observations.shape
    nif = NUM_INPUT_FRAMES
    assert num_obs > nif and nif > 1
    hw = h * w
    nc = nif * C_LAT

    k_tgt, k_time, k_noise = jax.random.split(key, 3)

    # --- frame selection (glue, mirrors the torch indexing) -----------------
    target_idx = jax.random.randint(k_tgt, (b,), nif, num_obs)
    offsets = jnp.arange(nif + 1) - nif                      # inputs..., target
    frame_idx = target_idx[:, None] + offsets[None, :]       # (b, nif+1)
    all_frames = observations[jnp.arange(b)[:, None], frame_idx]  # (b,nif+1,C,H,W)

    # Contiguous reshape (no transpose) to (b, (nif+1)*C_in, H*W); bf16 staging
    # halves HBM traffic for the kernel's largest inputs.
    x = all_frames.reshape(b, (nif + 1) * c_in, hw).astype(jnp.bfloat16)

    timestamps = jax.random.uniform(k_time, (b,), jnp.float32)
    noise = jax.random.normal(k_noise, (b, nc, hw), jnp.bfloat16)

    rec, tgt = fused_forward(
        timestamps, x, noise, params,
        sigma=SIGMA, noise_std=NOISE_STD, state_size=STATE_SIZE, c_lat=C_LAT)

    return {
        "observations": observations,
        "reconstructed_vectors": rec.reshape(b, STATE_SIZE, h, w),
        "target_vectors": tgt.reshape(b, STATE_SIZE, h, w),
    }


def init_params(key, c_in=C_IN):
    ks = jax.random.split(key, 3)
    nif = NUM_INPUT_FRAMES
    nc = nif * C_LAT

    # per-frame 1x1-conv encoder weight, expanded to a block-diagonal matmul
    # over the (frame, channel)-flattened input so the whole encoder is one dot.
    w_e = jax.random.normal(ks[0], (c_in, C_LAT), jnp.float32) * 0.2
    b_e = jnp.zeros((C_LAT,), jnp.float32)
    we_t = jnp.kron(jnp.eye(nif + 1, dtype=jnp.float32), w_e.T)   # ((nif+1)*C_LAT, (nif+1)*c_in)
    be = jnp.tile(b_e, nif + 1).reshape(-1, 1)                    # ((nif+1)*C_LAT, 1)

    w1 = jax.random.normal(ks[1], (nc, HIDDEN), jnp.float32) * 0.1
    w2 = jax.random.normal(ks[2], (HIDDEN, STATE_SIZE), jnp.float32) * 0.1
    return {
        "we_t": we_t,
        "be": be,
        "w1_t": w1.T,                                  # (HIDDEN, nc)
        "b1": jnp.zeros((HIDDEN, 1), jnp.float32),
        "w2_t": w2.T,                                  # (STATE_SIZE, HIDDEN)
        "b2": jnp.zeros((STATE_SIZE, 1), jnp.float32),
    }


if __name__ == "__main__":
    key = jax.random.PRNGKey(0)
    k_obs, k_param, k_fwd = jax.random.split(key, 3)

    b, num_obs, c_in, h, w = 2, 4, C_IN, 16, 16
    observations = jax.random.normal(k_obs, (b, num_obs, c_in, h, w), jnp.float32)
    params = init_params(k_param)

    out = jax.jit(model_forward)(observations, params, k_fwd)
    jax.block_until_ready(out)

    assert out["reconstructed_vectors"].shape == (b, STATE_SIZE, h, w)
    assert out["target_vectors"].shape == (b, STATE_SIZE, h, w)
    assert bool(jnp.all(jnp.isfinite(out["reconstructed_vectors"])))
    assert bool(jnp.all(jnp.isfinite(out["target_vectors"])))
    print("KERNEL_OK")
</pallas_src>

<mosaic_0001>
module attributes {stable_mosaic.version = 11 : i64} {
  func.func @_fused_kernel(%arg0: i32, %arg1: i32, %arg2: memref<2xf32, #tpu.memory_space<smem>>, %arg3: memref<1x9x256xbf16, #tpu.memory_space<vmem>>, %arg4: memref<1x16x256xbf16, #tpu.memory_space<vmem>>, %arg5: memref<24x9xf32, #tpu.memory_space<vmem>>, %arg6: memref<24x1xf32, #tpu.memory_space<vmem>>, %arg7: memref<32x16xf32, #tpu.memory_space<vmem>>, %arg8: memref<32x1xf32, #tpu.memory_space<vmem>>, %arg9: memref<8x32xf32, #tpu.memory_space<vmem>>, %arg10: memref<8x1xf32, #tpu.memory_space<vmem>>, %arg11: memref<1x8x256xf32, #tpu.memory_space<vmem>>, %arg12: memref<1x8x256xf32, #tpu.memory_space<vmem>>) attributes {dimension_semantics = [#tpu.dimension_semantics<parallel>, #tpu.dimension_semantics<parallel>], iteration_bounds = array<i64: 2, 1>, scalar_prefetch = 0 : i64, scratch_operands = 0 : i64, tpu.core_type = #tpu.core_type<tc>, window_params = [{transform_indices = @transform_0, window_bounds = array<i64: 2>}, {transform_indices = @transform_1, window_bounds = array<i64: 1, 9, 256>}, {transform_indices = @transform_2, window_bounds = array<i64: 1, 16, 256>}, {pipeline_mode = #tpu.pipeline_mode<synchronous>, transform_indices = @transform_3, window_bounds = array<i64: 24, 9>}, {pipeline_mode = #tpu.pipeline_mode<synchronous>, transform_indices = @transform_4, window_bounds = array<i64: 24, 1>}, {pipeline_mode = #tpu.pipeline_mode<synchronous>, transform_indices = @transform_5, window_bounds = array<i64: 32, 16>}, {pipeline_mode = #tpu.pipeline_mode<synchronous>, transform_indices = @transform_6, window_bounds = array<i64: 32, 1>}, {pipeline_mode = #tpu.pipeline_mode<synchronous>, transform_indices = @transform_7, window_bounds = array<i64: 8, 32>}, {pipeline_mode = #tpu.pipeline_mode<synchronous>, transform_indices = @transform_8, window_bounds = array<i64: 8, 1>}, {transform_indices = @transform_9, window_bounds = array<i64: 1, 8, 256>}, {transform_indices = @transform_10, window_bounds = array<i64: 1, 8, 256>}]} {
    %0 = arith.index_cast %arg0 : i32 to index
    %1 = memref.load %arg2[%0] : memref<2xf32, #tpu.memory_space<smem>>
    %cst = arith.constant 0.899999976 : f32
    %2 = arith.mulf %cst, %1 : f32
    %cst_0 = arith.constant 1.000000e+00 : f32
    %3 = arith.subf %cst_0, %2 : f32
    %cst_1 = arith.constant 1.000000e+00 : f32
    %4 = arith.divf %cst_1, %3 : f32
    %c0 = arith.constant 0 : index
    %c0_2 = arith.constant 0 : index
    %c0_3 = arith.constant 0 : index
    %5 = vector.load %arg3[%c0, %c0_2, %c0_3] : memref<1x9x256xbf16, #tpu.memory_space<vmem>>, vector<1x9x256xbf16>
    %6 = vector.shape_cast %5 : vector<1x9x256xbf16> to vector<9x256xbf16>
    %7 = arith.extf %6 : vector<9x256xbf16> to vector<9x256xf32>
    %c0_4 = arith.constant 0 : index
    %c0_5 = arith.constant 0 : index
    %8 = vector.load %arg5[%c0_4, %c0_5] : memref<24x9xf32, #tpu.memory_space<vmem>>, vector<24x9xf32>
    %cst_6 = arith.constant dense<0.000000e+00> : vector<24x256xf32>
    %9 = tpu.matmul %8, %7, %cst_6 {dimension_numbers = #tpu.dot_dimension_numbers<[1], [0], [0], [1], [0, 0, 1, 1], [], []>} : vector<24x9xf32>, vector<9x256xf32>, vector<24x256xf32> -> vector<24x256xf32>
    %c0_7 = arith.constant 0 : index
    %c0_8 = arith.constant 0 : index
    %10 = vector.load %arg6[%c0_7, %c0_8] : memref<24x1xf32, #tpu.memory_space<vmem>>, vector<24x1xf32>
    %11 = vector.broadcast %10 : vector<24x1xf32> to vector<24x256xf32>
    %12 = arith.addf %9, %11 : vector<24x256xf32>
    %13 = math.tanh %12 : vector<24x256xf32>
    %14 = vector.extract_strided_slice %13 {offsets = [0, 0], sizes = [16, 256], strides = [1, 1]} : vector<24x256xf32> to vector<16x256xf32>
    %15 = vector.extract_strided_slice %13 {offsets = [8, 0], sizes = [16, 256], strides = [1, 1]} : vector<24x256xf32> to vector<16x256xf32>
    %16 = vector.broadcast %3 : f32 to vector<16x256xf32>
    %17 = arith.mulf %16, %14 : vector<16x256xf32>
    %18 = vector.broadcast %1 : f32 to vector<16x256xf32>
    %19 = arith.mulf %18, %15 : vector<16x256xf32>
    %20 = arith.addf %17, %19 : vector<16x256xf32>
    %c0_9 = arith.constant 0 : index
    %c0_10 = arith.constant 0 : index
    %c0_11 = arith.constant 0 : index
    %21 = vector.load %arg4[%c0_9, %c0_10, %c0_11] : memref<1x16x256xbf16, #tpu.memory_space<vmem>>, vector<1x16x256xbf16>
    %22 = vector.shape_cast %21 : vector<1x16x256xbf16> to vector<16x256xbf16>
    %23 = arith.extf %22 : vector<16x256xbf16> to vector<16x256xf32>
    %cst_12 = arith.constant 1.000000e-01 : f32
    %24 = vector.broadcast %cst_12 : f32 to vector<16x256xf32>
    %25 = arith.mulf %23, %24 : vector<16x256xf32>
    %26 = arith.addf %20, %25 : vector<16x256xf32>
    %27 = vector.extract_strided_slice %15 {offsets = [8, 0], sizes = [8, 256], strides = [1, 1]} : vector<16x256xf32> to vector<8x256xf32>
    %28 = vector.extract_strided_slice %20 {offsets = [8, 0], sizes = [8, 256], strides = [1, 1]} : vector<16x256xf32> to vector<8x256xf32>
    %cst_13 = arith.constant 0.899999976 : f32
    %29 = vector.broadcast %cst_13 : f32 to vector<8x256xf32>
    %30 = arith.mulf %29, %28 : vector<8x256xf32>
    %31 = arith.subf %27, %30 : vector<8x256xf32>
    %32 = vector.broadcast %4 : f32 to vector<8x256xf32>
    %33 = arith.mulf %31, %32 : vector<8x256xf32>
    %c0_14 = arith.constant 0 : index
    %c0_15 = arith.constant 0 : index
    %c0_16 = arith.constant 0 : index
    %34 = vector.load %arg12[%c0_14, %c0_15, %c0_16] : memref<1x8x256xf32, #tpu.memory_space<vmem>>, vector<1x8x256xf32>
    %35 = vector.shape_cast %34 : vector<1x8x256xf32> to vector<8x256xf32>
    %36 = vector.shape_cast %33 : vector<8x256xf32> to vector<1x8x256xf32>
    tpu.vector_store %arg12[%c0_14, %c0_15, %c0_16], %36 {strides = array<i32>} : memref<1x8x256xf32, #tpu.memory_space<vmem>>, vector<1x8x256xf32>,
    %c0_17 = arith.constant 0 : index
    %c0_18 = arith.constant 0 : index
    %37 = vector.load %arg7[%c0_17, %c0_18] : memref<32x16xf32, #tpu.memory_space<vmem>>, vector<32x16xf32>
    %cst_19 = arith.constant dense<0.000000e+00> : vector<32x256xf32>
    %38 = tpu.matmul %37, %26, %cst_19 {dimension_numbers = #tpu.dot_dimension_numbers<[1], [0], [0], [1], [0, 0, 1, 1], [], []>} : vector<32x16xf32>, vector<16x256xf32>, vector<32x256xf32> -> vector<32x256xf32>
    %c0_20 = arith.constant 0 : index
    %c0_21 = arith.constant 0 : index
    %39 = vector.load %arg8[%c0_20, %c0_21] : memref<32x1xf32, #tpu.memory_space<vmem>>, vector<32x1xf32>
    %40 = vector.broadcast %39 : vector<32x1xf32> to vector<32x256xf32>
    %41 = arith.addf %38, %40 : vector<32x256xf32>
    %42 = arith.mulf %41, %41 : vector<32x256xf32>
    %43 = arith.mulf %41, %42 : vector<32x256xf32>
    %cst_22 = arith.constant 4.471500e-02 : f32
    %44 = vector.broadcast %cst_22 : f32 to vector<32x256xf32>
    %45 = arith.mulf %44, %43 : vector<32x256xf32>
    %46 = arith.addf %41, %45 : vector<32x256xf32>
    %cst_23 = arith.constant 0.797884583 : f32
    %47 = vector.broadcast %cst_23 : f32 to vector<32x256xf32>
    %48 = arith.mulf %47, %46 : vector<32x256xf32>
    %49 = math.tanh %48 : vector<32x256xf32>
    %cst_24 = arith.constant 1.000000e+00 : f32
    %50 = vector.broadcast %cst_24 : f32 to vector<32x256xf32>
    %51 = arith.addf %50, %49 : vector<32x256xf32>
    %cst_25 = arith.constant 5.000000e-01 : f32
    %52 = vector.broadcast %cst_25 : f32 to vector<32x256xf32>
    %53 = arith.mulf %52, %51 : vector<32x256xf32>
    %54 = arith.mulf %41, %53 : vector<32x256xf32>
    %c0_26 = arith.constant 0 : index
    %c0_27 = arith.constant 0 : index
    %55 = vector.load %arg9[%c0_26, %c0_27] : memref<8x32xf32, #tpu.memory_space<vmem>>, vector<8x32xf32>
    %cst_28 = arith.constant dense<0.000000e+00> : vector<8x256xf32>
    %56 = tpu.matmul %55, %54, %cst_28 {dimension_numbers = #tpu.dot_dimension_numbers<[1], [0], [0], [1], [0, 0, 1, 1], [], []>} : vector<8x32xf32>, vector<32x256xf32>, vector<8x256xf32> -> vector<8x256xf32>
    %c0_29 = arith.constant 0 : index
    %c0_30 = arith.constant 0 : index
    %57 = vector.load %arg10[%c0_29, %c0_30] : memref<8x1xf32, #tpu.memory_space<vmem>>, vector<8x1xf32>
    %58 = vector.broadcast %57 : vector<8x1xf32> to vector<8x256xf32>
    %59 = arith.addf %56, %58 : vector<8x256xf32>
    %c0_31 = arith.constant 0 : index
    %c0_32 = arith.constant 0 : index
    %c0_33 = arith.constant 0 : index
    %60 = vector.load %arg11[%c0_31, %c0_32, %c0_33] : memref<1x8x256xf32, #tpu.memory_space<vmem>>, vector<1x8x256xf32>
    %61 = vector.shape_cast %60 : vector<1x8x256xf32> to vector<8x256xf32>
    %62 = vector.shape_cast %59 : vector<8x256xf32> to vector<1x8x256xf32>
    tpu.vector_store %arg11[%c0_31, %c0_32, %c0_33], %62 {strides = array<i32>} : memref<1x8x256xf32, #tpu.memory_space<vmem>>, vector<1x8x256xf32>,
    return
  }
  func.func @transform_0(%arg0: i32, %arg1: i32) -> i32 {
    %c0_i32 = arith.constant 0 : i32
    %c0_i32_0 = arith.constant 0 : i32
    return %c0_i32 : i32
  }
  func.func @transform_1(%arg0: i32, %arg1: i32) -> (i32, i32, i32) {
    %c0_i32 = arith.constant 0 : i32
    %c0_i32_0 = arith.constant 0 : i32
    return %arg0, %c0_i32, %arg1 : i32, i32, i32
  }
  func.func @transform_2(%arg0: i32, %arg1: i32) -> (i32, i32, i32) {
    %c0_i32 = arith.constant 0 : i32
    %c0_i32_0 = arith.constant 0 : i32
    return %arg0, %c0_i32, %arg1 : i32, i32, i32
  }
  func.func @transform_3(%arg0: i32, %arg1: i32) -> (i32, i32) {
    %c0_i32 = arith.constant 0 : i32
    %c0_i32_0 = arith.constant 0 : i32
    %c0_i32_1 = arith.constant 0 : i32
    return %c0_i32, %c0_i32_0 : i32, i32
  }
  func.func @transform_4(%arg0: i32, %arg1: i32) -> (i32, i32) {
    %c0_i32 = arith.constant 0 : i32
    %c0_i32_0 = arith.constant 0 : i32
    %c0_i32_1 = arith.constant 0 : i32
    return %c0_i32, %c0_i32_0 : i32, i32
  }
  func.func @transform_5(%arg0: i32, %arg1: i32) -> (i32, i32) {
    %c0_i32 = arith.constant 0 : i32
    %c0_i32_0 = arith.constant 0 : i32
    %c0_i32_1 = arith.constant 0 : i32
    return %c0_i32, %c0_i32_0 : i32, i32
  }
  func.func @transform_6(%arg0: i32, %arg1: i32) -> (i32, i32) {
    %c0_i32 = arith.constant 0 : i32
    %c0_i32_0 = arith.constant 0 : i32
    %c0_i32_1 = arith.constant 0 : i32
    return %c0_i32, %c0_i32_0 : i32, i32
  }
  func.func @transform_7(%arg0: i32, %arg1: i32) -> (i32, i32) {
    %c0_i32 = arith.constant 0 : i32
    %c0_i32_0 = arith.constant 0 : i32
    %c0_i32_1 = arith.constant 0 : i32
    return %c0_i32, %c0_i32_0 : i32, i32
  }
  func.func @transform_8(%arg0: i32, %arg1: i32) -> (i32, i32) {
    %c0_i32 = arith.constant 0 : i32
    %c0_i32_0 = arith.constant 0 : i32
    %c0_i32_1 = arith.constant 0 : i32
    return %c0_i32, %c0_i32_0 : i32, i32
  }
  func.func @transform_9(%arg0: i32, %arg1: i32) -> (i32, i32, i32) {
    %c0_i32 = arith.constant 0 : i32
    %c0_i32_0 = arith.constant 0 : i32
    return %arg0, %c0_i32, %arg1 : i32, i32, i32
  }
  func.func @transform_10(%arg0: i32, %arg1: i32) -> (i32, i32, i32) {
    %c0_i32 = arith.constant 0 : i32
    %c0_i32_0 = arith.constant 0 : i32
    return %arg0, %c0_i32, %arg1 : i32, i32, i32
  }
}

</mosaic_0001>

<llo_original>
// kernel: model_forward.3
$region0: #{model_forward.3}
  #allocation0 [shape = 'u32[]', space=smem, size = 0x4, offset = 0x4, fixed_abs, tag = 'smem constant byte address 0x4 - core index']
  #allocation1 [shape = 'u32[144,128]{1,0:T(1,128)}', space=vmem, size = 0x12000, scoped, tag = 'internal scratch']
  %s0 = inlined_call_operand.vmem [shape: f32[2], index: 0, kind: input, shape index: {}]
  %s1 = inlined_call_operand.vmem [shape: bf16[2,9,256], index: 1, kind: input, shape index: {}]
  %s2 = inlined_call_operand.vmem [shape: bf16[2,16,256], index: 2, kind: input, shape index: {}]
  %s3 = inlined_call_operand.vmem [shape: f32[24,9], index: 3, kind: input, shape index: {}]
  %s4 = inlined_call_operand.vmem [shape: f32[24,1], index: 4, kind: input, shape index: {}]
  %s5 = inlined_call_operand.vmem [shape: f32[32,16], index: 5, kind: input, shape index: {}]
  %s6 = inlined_call_operand.vmem [shape: f32[32,1], index: 6, kind: input, shape index: {}]
  %s7 = inlined_call_operand.vmem [shape: f32[8,32], index: 7, kind: input, shape index: {}]
  %s8 = inlined_call_operand.vmem [shape: f32[8,1], index: 8, kind: input, shape index: {}]
  %s9 = inlined_call_operand.vmem [shape: f32[2,8,256], index: 9, kind: output, shape index: {0}]
  %s10 = inlined_call_operand.vmem [shape: f32[2,8,256], index: 10, kind: output, shape index: {1}]
  %11 = xla_tuple %s9, %s10
  %s12 = sld [smem:[#allocation0]]
  $region81: #{model_forward.3} parent=0
    _
  %s14 = ssub.s32 1, %s12
  %s15 = scalar_select 0, %s14, %s12
  $region1: #{model_forward.3} parent=0
    #allocation2 [shape = 'u8[512]{0}', space=smem, size = 0x200, scoped, tag = 'input window, operand 0, single buffered']
    #allocation3 [shape = 's32[2]{0}', space=sflag, size = 0x8, scoped, tag = 'scoped memory for model_forward.3']
    %16 = vsyncpa [#allocation3], 0
    loop: start=0, step=1, limit=4
    $region2: #{model_forward.3} parent=1 // loop_pre_header
      _
    $region3: #{model_forward.3} parent=1 // loop_header
      %s18 = sphi 0, %s22
      %p19 = scmp.ge.s32.totalorder %s18, 4
      %s25 = sphi 0, %s37
      %s26 = sphi 0, %s33
      %s27 = sphi 0, %s25
      %s28 = sphi 0, %s26
      %s29 = sphi 0, %s27
      %s30 = sphi 0, %s28
      %s38 = sphi 0, %s38
      %s40 = sphi 0, %s38
      %s41 = sphi 0, %s40
      %s55 = sphi 0, %s41
      %s63 = sphi 0, %s65
      %s66 = sphi 0, %s63
      %s67 = sphi 0, %s66
      %s83 = sphi 0, %s67
      %s91 = sphi 0, %s93
      %s94 = sphi 0, %s91
      %s95 = sphi 0, %s94
      %s111 = sphi 0, %s95
      %s115 = sphi 0, %s115
      %s117 = sphi 0, %s115
      %s118 = sphi 0, %s117
      %s132 = sphi 0, %s118
      %s136 = sphi 0, %s136
      %s138 = sphi 0, %s136
      %s139 = sphi 0, %s138
      %s153 = sphi 0, %s139
      %s157 = sphi 0, %s157
      %s159 = sphi 0, %s157
      %s160 = sphi 0, %s159
      %s174 = sphi 0, %s160
      %s178 = sphi 0, %s178
      %s180 = sphi 0, %s178
      %s181 = sphi 0, %s180
      %s195 = sphi 0, %s181
      %s199 = sphi 0, %s199
      %s201 = sphi 0, %s199
      %s202 = sphi 0, %s201
      %s216 = sphi 0, %s202
      %s220 = sphi 0, %s220
      %s222 = sphi 0, %s220
      %s223 = sphi 0, %s222
      %s237 = sphi 0, %s223
      %s245 = sphi 0, %s247
      %s248 = sphi 0, %s245
      %s249 = sphi 0, %s248
      %s265 = sphi 0, %s249
      %s273 = sphi 0, %s275
      %s276 = sphi 0, %s273
      %s277 = sphi 0, %s276
      %s293 = sphi 0, %s277
    $region4: #{model_forward.3} parent=1 // loop_header_branch
      %21 = sbr.rel (%p19) target = $region8
    $region5: #{model_forward.3} parent=1 // loop_body
      %s23 = ssub.s32 %s18, 1
      %s24 = ssub.s32 %s18, 2
      %s31 = sadd.s32 1, %s26
      %p32 = scmp.ge.s32.totalorder %s31, 1
      %s33 = scalar_select %p32, 0, %s31
      %s34 = sadd.s32 1, %s25
      %s35 = scalar_select %p32, %s34, %s25
      %p36 = scmp.ge.s32.totalorder %s35, 2
      %s37 = scalar_select %p36, 0, %s35
      %s39 = sadd.s32 %s38, 1
      %p42 = scmp.eq.s32.totalorder %s18, 1
      %p43 = scmp.ne.s32.totalorder %s38, %s40
      %p44 = scmp.eq.s32.totalorder %s18, 0
      %p45 = por %p43, %p44
      %p46 = scmp.ne.s32.totalorder %s38, %s40
      %p47 = scmp.eq.s32.totalorder %s23, 1
      %p48 = por %p46, %p47
      %p49 = scmp.ne.s32.totalorder %s40, %s41
      %p50 = scmp.eq.s32.totalorder %s23, 0
      %p51 = por %p49, %p50
      %p52 = scmp.ne.s32.totalorder %s40, %s41
      %p53 = scmp.eq.s32.totalorder %s24, 1
      %p54 = por %p52, %p53
      %p56 = scmp.ne.s32.totalorder %s41, %s55
      %p57 = scmp.eq.s32.totalorder %s24, 0
      %p58 = por %p56, %p57
      %s59 = ssub.s32 %s25, %s37
      %s60 = ssub.s32 %s26, %s33
      %s61 = sor.u32 %s59, %s60
      %p62 = scmp.eq.s32.totalorder %s61, 0
      %s64 = sadd.s32 %s63, 1
      %s65 = scalar_select %p62, %s63, %s64
      %p68 = pneg %p62
      %p69 = scmp.eq.s32.totalorder %s18, 1
      %p70 = por %p68, %p69
      %p71 = scmp.ne.s32.totalorder %s63, %s66
      %p72 = scmp.eq.s32.totalorder %s18, 0
      %p73 = por %p71, %p72
      %p74 = scmp.ne.s32.totalorder %s63, %s66
      %p75 = scmp.eq.s32.totalorder %s23, 1
      %p76 = por %p74, %p75
      %p77 = scmp.ne.s32.totalorder %s66, %s67
      %p78 = scmp.eq.s32.totalorder %s23, 0
      %p79 = por %p77, %p78
      %p80 = scmp.ne.s32.totalorder %s66, %s67
      %p81 = scmp.eq.s32.totalorder %s24, 1
      %p82 = por %p80, %p81
      %p84 = scmp.ne.s32.totalorder %s67, %s83
      %p85 = scmp.eq.s32.totalorder %s24, 0
      %p86 = por %p84, %p85
      %s87 = ssub.s32 %s25, %s37
      %s88 = ssub.s32 %s26, %s33
      %s89 = sor.u32 %s87, %s88
      %p90 = scmp.eq.s32.totalorder %s89, 0
      %s92 = sadd.s32 %s91, 1
      %s93 = scalar_select %p90, %s91, %s92
      %p96 = pneg %p90
      %p97 = scmp.eq.s32.totalorder %s18, 1
      %p98 = por %p96, %p97
      %p99 = scmp.ne.s32.totalorder %s91, %s94
      %p100 = scmp.eq.s32.totalorder %s18, 0
      %p101 = por %p99, %p100
      %p102 = scmp.ne.s32.totalorder %s91, %s94
      %p103 = scmp.eq.s32.totalorder %s23, 1
      %p104 = por %p102, %p103
      %p105 = scmp.ne.s32.totalorder %s94, %s95
      %p106 = scmp.eq.s32.totalorder %s23, 0
      %p107 = por %p105, %p106
      %p108 = scmp.ne.s32.totalorder %s94, %s95
      %p109 = scmp.eq.s32.totalorder %s24, 1
      %p110 = por %p108, %p109
      %p112 = scmp.ne.s32.totalorder %s95, %s111
      %p113 = scmp.eq.s32.totalorder %s24, 0
      %p114 = por %p112, %p113
      %s116 = sadd.s32 %s115, 1
      %p119 = scmp.eq.s32.totalorder %s18, 1
      %p120 = scmp.ne.s32.totalorder %s115, %s117
      %p121 = scmp.eq.s32.totalorder %s18, 0
      %p122 = por %p120, %p121
      %p123 = scmp.ne.s32.totalorder %s115, %s117
      %p124 = scmp.eq.s32.totalorder %s23, 1
      %p125 = por %p123, %p124
      %p126 = scmp.ne.s32.totalorder %s117, %s118
      %p127 = scmp.eq.s32.totalorder %s23, 0
      %p128 = por %p126, %p127
      %p129 = scmp.ne.s32.totalorder %s117, %s118
      %p130 = scmp.eq.s32.totalorder %s24, 1
      %p131 = por %p129, %p130
      %p133 = scmp.ne.s32.totalorder %s118, %s132
      %p134 = scmp.eq.s32.totalorder %s24, 0
      %p135 = por %p133, %p134
      %s137 = sadd.s32 %s136, 1
      %p140 = scmp.eq.s32.totalorder %s18, 1
      %p141 = scmp.ne.s32.totalorder %s136, %s138
      %p142 = scmp.eq.s32.totalorder %s18, 0
      %p143 = por %p141, %p142
      %p144 = scmp.ne.s32.totalorder %s136, %s138
      %p145 = scmp.eq.s32.totalorder %s23, 1
      %p146 = por %p144, %p145
      %p147 = scmp.ne.s32.totalorder %s138, %s139
      %p148 = scmp.eq.s32.totalorder %s23, 0
      %p149 = por %p147, %p148
      %p150 = scmp.ne.s32.totalorder %s138, %s139
      %p151 = scmp.eq.s32.totalorder %s24, 1
      %p152 = por %p150, %p151
      %p154 = scmp.ne.s32.totalorder %s139, %s153
      %p155 = scmp.eq.s32.totalorder %s24, 0
      %p156 = por %p154, %p155
      %s158 = sadd.s32 %s157, 1
      %p161 = scmp.eq.s32.totalorder %s18, 1
      %p162 = scmp.ne.s32.totalorder %s157, %s159
      %p163 = scmp.eq.s32.totalorder %s18, 0
      %p164 = por %p162, %p163
      %p165 = scmp.ne.s32.totalorder %s157, %s159
      %p166 = scmp.eq.s32.totalorder %s23, 1
      %p167 = por %p165, %p166
      %p168 = scmp.ne.s32.totalorder %s159, %s160
      %p169 = scmp.eq.s32.totalorder %s23, 0
      %p170 = por %p168, %p169
      %p171 = scmp.ne.s32.totalorder %s159, %s160
      %p172 = scmp.eq.s32.totalorder %s24, 1
      %p173 = por %p171, %p172
      %p175 = scmp.ne.s32.totalorder %s160, %s174
      %p176 = scmp.eq.s32.totalorder %s24, 0
      %p177 = por %p175, %p176
      %s179 = sadd.s32 %s178, 1
      %p182 = scmp.eq.s32.totalorder %s18, 1
      %p183 = scmp.ne.s32.totalorder %s178, %s180
      %p184 = scmp.eq.s32.totalorder %s18, 0
      %p185 = por %p183, %p184
      %p186 = scmp.ne.s32.totalorder %s178, %s180
      %p187 = scmp.eq.s32.totalorder %s23, 1
      %p188 = por %p186, %p187
      %p189 = scmp.ne.s32.totalorder %s180, %s181
      %p190 = scmp.eq.s32.totalorder %s23, 0
      %p191 = por %p189, %p190
      %p192 = scmp.ne.s32.totalorder %s180, %s181
      %p193 = scmp.eq.s32.totalorder %s24, 1
      %p194 = por %p192, %p193
      %p196 = scmp.ne.s32.totalorder %s181, %s195
      %p197 = scmp.eq.s32.totalorder %s24, 0
      %p198 = por %p196, %p197
      %s200 = sadd.s32 %s199, 1
      %p203 = scmp.eq.s32.totalorder %s18, 1
      %p204 = scmp.ne.s32.totalorder %s199, %s201
      %p205 = scmp.eq.s32.totalorder %s18, 0
      %p206 = por %p204, %p205
      %p207 = scmp.ne.s32.totalorder %s199, %s201
      %p208 = scmp.eq.s32.totalorder %s23, 1
      %p209 = por %p207, %p208
      %p210 = scmp.ne.s32.totalorder %s201, %s202
      %p211 = scmp.eq.s32.totalorder %s23, 0
      %p212 = por %p210, %p211
      %p213 = scmp.ne.s32.totalorder %s201, %s202
      %p214 = scmp.eq.s32.totalorder %s24, 1
      %p215 = por %p213, %p214
      %p217 = scmp.ne.s32.totalorder %s202, %s216
      %p218 = scmp.eq.s32.totalorder %s24, 0
      %p219 = por %p217, %p218
      %s221 = sadd.s32 %s220, 1
      %p224 = scmp.eq.s32.totalorder %s18, 1
      %p225 = scmp.ne.s32.totalorder %s220, %s222
      %p226 = scmp.eq.s32.totalorder %s18, 0
      %p227 = por %p225, %p226
      %p228 = scmp.ne.s32.totalorder %s220, %s222
      %p229 = scmp.eq.s32.totalorder %s23, 1
      %p230 = por %p228, %p229
      %p231 = scmp.ne.s32.totalorder %s222, %s223
      %p232 = scmp.eq.s32.totalorder %s23, 0
      %p233 = por %p231, %p232
      %p234 = scmp.ne.s32.totalorder %s222, %s223
      %p235 = scmp.eq.s32.totalorder %s24, 1
      %p236 = por %p234, %p235
      %p238 = scmp.ne.s32.totalorder %s223, %s237
      %p239 = scmp.eq.s32.totalorder %s24, 0
      %p240 = por %p238, %p239
      %s241 = ssub.s32 %s25, %s37
      %s242 = ssub.s32 %s26, %s33
      %s243 = sor.u32 %s241, %s242
      %p244 = scmp.eq.s32.totalorder %s243, 0
      %s246 = sadd.s32 %s245, 1
      %s247 = scalar_select %p244, %s245, %s246
      %p250 = pneg %p244
      %p251 = scmp.eq.s32.totalorder %s18, 1
      %p252 = por %p250, %p251
      %p253 = scmp.ne.s32.totalorder %s245, %s248
      %p254 = scmp.eq.s32.totalorder %s18, 0
      %p255 = por %p253, %p254
      %p256 = scmp.ne.s32.totalorder %s245, %s248
      %p257 = scmp.eq.s32.totalorder %s23, 1
      %p258 = por %p256, %p257
      %p259 = scmp.ne.s32.totalorder %s248, %s249
      %p260 = scmp.eq.s32.totalorder %s23, 0
      %p261 = por %p259, %p260
      %p262 = scmp.ne.s32.totalorder %s248, %s249
      %p263 = scmp.eq.s32.totalorder %s24, 1
      %p264 = por %p262, %p263
      %p266 = scmp.ne.s32.totalorder %s249, %s265
      %p267 = scmp.eq.s32.totalorder %s24, 0
      %p268 = por %p266, %p267
      %s269 = ssub.s32 %s25, %s37
      %s270 = ssub.s32 %s26, %s33
      %s271 = sor.u32 %s269, %s270
      %p272 = scmp.eq.s32.totalorder %s271, 0
      %s274 = sadd.s32 %s273, 1
      %s275 = scalar_select %p272, %s273, %s274
      %p278 = pneg %p272
      %p279 = scmp.eq.s32.totalorder %s18, 1
      %p280 = por %p278, %p279
      %p281 = scmp.ne.s32.totalorder %s273, %s276
      %p282 = scmp.eq.s32.totalorder %s18, 0
      %p283 = por %p281, %p282
      %p284 = scmp.ne.s32.totalorder %s273, %s276
      %p285 = scmp.eq.s32.totalorder %s23, 1
      %p286 = por %p284, %p285
      %p287 = scmp.ne.s32.totalorder %s276, %s277
      %p288 = scmp.eq.s32.totalorder %s23, 0
      %p289 = por %p287, %p288
      %p290 = scmp.ne.s32.totalorder %s276, %s277
      %p291 = scmp.eq.s32.totalorder %s24, 1
      %p292 = por %p290, %p291
      %p294 = scmp.ne.s32.totalorder %s277, %s293
      %p295 = scmp.eq.s32.totalorder %s24, 0
      %p296 = por %p294, %p295
      %p297 = scmp.le.s32.totalorder 1, %s18
      %p298 = scmp.lt.s32.totalorder %s18, 3
      %p299 = pnand %p297, %p298
      %p300 = pneg %p299
      // Predicated region
      $region9: #{model_forward.3} parent=5 // pred_check
        _
      $region10: #{model_forward.3} parent=5 // pred_check_branch
        %302 = sbr.rel (%p299) target = $region12
      $region11: #{model_forward.3} parent=5 // pred_region
        %s303 = ssub.s32 %s18, 1
        // Predicated region
        $region13: #{model_forward.3} parent=11 // pred_check
          %p304 = pneg %p51
        $region14: #{model_forward.3} parent=11 // pred_check_branch
          %306 = sbr.rel (%p304) target = $region16
        $region15: #{model_forward.3} parent=11 // pred_region
          %s308 = ssub.s32 16, 16
          %309 = vsyncadd [#allocation3], %s308
          %s311 = sshll.u32 %s0, 4
          %s312 = int_to_ptr.vmem [resolvable:$true] %s311
          %314 = dma.vmem_to_smem %s312, 16, [#allocation2], [#allocation3]
        $region16: #{model_forward.3} parent=11 // pred_fallthru
          _
        // Predicated region
        $region17: #{model_forward.3} parent=11 // pred_check
          %p315 = pneg %p128
        $region18: #{model_forward.3} parent=11 // pred_check_branch
          %317 = sbr.rel (%p315) target = $region20
        $region19: #{model_forward.3} parent=11 // pred_region
          _
        $region20: #{model_forward.3} parent=11 // pred_fallthru
          _
        // Predicated region
        $region21: #{model_forward.3} parent=11 // pred_check
          %p318 = pneg %p149
        $region22: #{model_forward.3} parent=11 // pred_check_branch
          %320 = sbr.rel (%p318) target = $region24
        $region23: #{model_forward.3} parent=11 // pred_region
          _
        $region24: #{model_forward.3} parent=11 // pred_fallthru
          _
        // Predicated region
        $region25: #{model_forward.3} parent=11 // pred_check
          %p321 = pneg %p170
        $region26: #{model_forward.3} parent=11 // pred_check_branch
          %323 = sbr.rel (%p321) target = $region28
        $region27: #{model_forward.3} parent=11 // pred_region
          _
        $region28: #{model_forward.3} parent=11 // pred_fallthru
          _
        // Predicated region
        $region29: #{model_forward.3} parent=11 // pred_check
          %p324 = pneg %p191
        $region30: #{model_forward.3} parent=11 // pred_check_branch
          %326 = sbr.rel (%p324) target = $region32
        $region31: #{model_forward.3} parent=11 // pred_region
          _
        $region32: #{model_forward.3} parent=11 // pred_fallthru
          _
        // Predicated region
        $region33: #{model_forward.3} parent=11 // pred_check
          %p327 = pneg %p212
        $region34: #{model_forward.3} parent=11 // pred_check_branch
          %329 = sbr.rel (%p327) target = $region36
        $region35: #{model_forward.3} parent=11 // pred_region
          _
        $region36: #{model_forward.3} parent=11 // pred_fallthru
          _
        // Predicated region
        $region37: #{model_forward.3} parent=11 // pred_check
          %p330 = pneg %p233
        $region38: #{model_forward.3} parent=11 // pred_check_branch
          %332 = sbr.rel (%p330) target = $region40
        $region39: #{model_forward.3} parent=11 // pred_region
          _
        $region40: #{model_forward.3} parent=11 // pred_fallthru
          _
      $region12: #{model_forward.3} parent=5 // pred_fallthru
        _
      %p333 = scmp.lt.s32.totalorder %s18, 2
      // Predicated region
      $region41: #{model_forward.3} parent=5 // pred_check
        %p334 = pneg %p333
      $region42: #{model_forward.3} parent=5 // pred_check_branch
        %336 = sbr.rel (%p334) target = $region44
      $region43: #{model_forward.3} parent=5 // pred_region
        // Predicated region
        $region45: #{model_forward.3} parent=43 // pred_check
          %p337 = pneg %p73
        $region46: #{model_forward.3} parent=43 // pred_check_branch
          %339 = sbr.rel (%p337) target = $region48
        $region47: #{model_forward.3} parent=43 // pred_region
          %s340 = smul.u32 2, %s26
          %p341 = scmp.lt.s32.totalorder %s25, 1
          %s342 = scalar_select %p341, %s25, 1
          %p343 = scmp.lt.s32.totalorder %s340, 1
          %s344 = scalar_select %p343, %s340, 1
          %s345 = smul.addr %s342, 4
          %s346 = sadd.s32 %s344, %s345
          %s347 = smul.addr %s346, 4
          %s348 = scalar_lea.vmem %s1, %s347
          %s349 = smul.u32 2, %s26
        $region48: #{model_forward.3} parent=43 // pred_fallthru
          _
        // Predicated region
        $region49: #{model_forward.3} parent=43 // pred_check
          %p350 = pneg %p101
        $region50: #{model_forward.3} parent=43 // pred_check_branch
          %352 = sbr.rel (%p350) target = $region52
        $region51: #{model_forward.3} parent=43 // pred_region
          %s353 = smul.u32 2, %s26
          %p354 = scmp.lt.s32.totalorder %s25, 1
          %s355 = scalar_select %p354, %s25, 1
          %p356 = scmp.lt.s32.totalorder %s353, 1
          %s357 = scalar_select %p356, %s353, 1
          %s358 = smul.addr %s355, 4
          %s359 = sadd.s32 %s357, %s358
          %s360 = smul.addr %s359, 4
          %s361 = scalar_lea.vmem %s2, %s360
          %s362 = smul.u32 2, %s26
        $region52: #{model_forward.3} parent=43 // pred_fallthru
          _
      $region44: #{model_forward.3} parent=5 // pred_fallthru
        _
      %p363 = scmp.le.s32.totalorder 1, %s18
      %p364 = scmp.lt.s32.totalorder %s18, 3
      %p365 = pnand %p363, %p364
      %p366 = pneg %p365
      // Predicated region
      $region53: #{model_forward.3} parent=5 // pred_check
        _
      $region54: #{model_forward.3} parent=5 // pred_check_branch
        %368 = sbr.rel (%p365) target = $region56
      $region55: #{model_forward.3} parent=5 // pred_region
        %s369 = ssub.s32 %s18, 1
        // Predicated region
        $region57: #{model_forward.3} parent=55 // pred_check
          %p370 = pneg %p51
        $region58: #{model_forward.3} parent=55 // pred_check_branch
          %372 = sbr.rel (%p370) target = $region60
        $region59: #{model_forward.3} parent=55 // pred_region
          %373 = dma.done [#allocation3], 16
        $region60: #{model_forward.3} parent=55 // pred_fallthru
          _
        %374 = sfence
        %p375 = pneg %p51
        %p376 = pneg %p48
        %s377 = smul.u32 2, %s28
        %p378 = scmp.lt.s32.totalorder %s27, 1
        %s379 = scalar_select %p378, %s27, 1
        %p380 = scmp.lt.s32.totalorder %s377, 1
        %s381 = scalar_select %p380, %s377, 1
        %s382 = smul.addr %s379, 4
        %s383 = sadd.s32 %s381, %s382
        %s384 = smul.addr %s383, 4
        %s385 = scalar_lea.vmem %s1, %s384
        %p386 = pneg %p79
        %p387 = pneg %p76
        %s388 = smul.u32 2, %s28
        %p389 = scmp.lt.s32.totalorder %s27, 1
        %s390 = scalar_select %p389, %s27, 1
        %p391 = scmp.lt.s32.totalorder %s388, 1
        %s392 = scalar_select %p391, %s388, 1
        %s393 = smul.addr %s390, 4
        %s394 = sadd.s32 %s392, %s393
        %s395 = smul.addr %s394, 4
        %s396 = scalar_lea.vmem %s2, %s395
        %p397 = pneg %p107
        %p398 = pneg %p104
        %p399 = pneg %p128
        %p400 = pneg %p125
        %p401 = pneg %p149
        %p402 = pneg %p146
        %p403 = pneg %p170
        %p404 = pneg %p167
        %p405 = pneg %p191
        %p406 = pneg %p188
        %p407 = pneg %p212
        %p408 = pneg %p209
        %p409 = pneg %p233
        %p410 = pneg %p230
        %p411 = pneg %p261
        %p412 = pneg %p258
        %s413 = smul.u32 2, %s28
        %p414 = scmp.lt.s32.totalorder %s27, 1
        %s415 = scalar_select %p414, %s27, 1
        %p416 = scmp.lt.s32.totalorder %s413, 1
        %s417 = scalar_select %p416, %s413, 1
        %s418 = smul.addr %s415, 2
        %s419 = sadd.s32 %s417, %s418
        %s420 = smul.addr %s419, 8
        %s421 = scalar_lea.vmem %s9, %s420
        %p422 = pneg %p289
        %p423 = pneg %p286
        %s424 = smul.u32 2, %s28
        %p425 = scmp.lt.s32.totalorder %s27, 1
        %s426 = scalar_select %p425, %s27, 1
        %p427 = scmp.lt.s32.totalorder %s424, 1
        %s428 = scalar_select %p427, %s424, 1
        %s429 = smul.addr %s426, 2
        %s430 = sadd.s32 %s428, %s429
        %s431 = smul.addr %s430, 8
        %s432 = scalar_lea.vmem %s10, %s431
        %s433 = smul.u32 2, %s28
        %p434 = scmp.lt.s32.totalorder %s27, 1
        %s435 = scalar_select %p434, %s27, 1
        %p436 = scmp.lt.s32.totalorder %s433, 1
        %s437 = scalar_select %p436, %s433, 1
        %s438 = smul.addr %s435, 4
        %s439 = sadd.s32 %s437, %s438
        %s440 = smul.addr %s439, 4
        %s441 = scalar_lea.vmem %s1, %s440
        %s442 = smul.u32 2, %s28
        %s443 = smul.u32 2, %s28
        %p444 = scmp.lt.s32.totalorder %s27, 1
        %s445 = scalar_select %p444, %s27, 1
        %p446 = scmp.lt.s32.totalorder %s443, 1
        %s447 = scalar_select %p446, %s443, 1
        %s448 = smul.addr %s445, 4
        %s449 = sadd.s32 %s447, %s448
        %s450 = smul.addr %s449, 4
        %s451 = scalar_lea.vmem %s2, %s450
        %s452 = smul.u32 2, %s28
        %s453 = smul.u32 2, %s28
        %p454 = scmp.lt.s32.totalorder %s27, 1
        %s455 = scalar_select %p454, %s27, 1
        %p456 = scmp.lt.s32.totalorder %s453, 1
        %s457 = scalar_select %p456, %s453, 1
        %s458 = smul.addr %s455, 2
        %s459 = sadd.s32 %s457, %s458
        %s460 = smul.addr %s459, 8
        %s461 = scalar_lea.vmem %s9, %s460
        %s462 = smul.u32 2, %s28
        %s463 = smul.u32 2, %s28
        %p464 = scmp.lt.s32.totalorder %s27, 1
        %s465 = scalar_select %p464, %s27, 1
        %p466 = scmp.lt.s32.totalorder %s463, 1
        %s467 = scalar_select %p466, %s463, 1
        %s468 = smul.addr %s465, 2
        %s469 = sadd.s32 %s467, %s468
        %s470 = smul.addr %s469, 8
        %s471 = scalar_lea.vmem %s10, %s470
        %s472 = smul.u32 2, %s28
        %s473 = sld [smem:[#allocation2 + %s27]]
        %s474 = smul.f32 %s473, 0.9
        %s475 = ssub.f32 1.0, %s474
        %v476 = vstv %s475
        %v477 = vrcp.pop %v476
        %s478 = vtos %v477
        %v479 = vld [vmem:[%s441] sm:$0xff]
        %v480 = vld [vmem:[%s441 + $0x8] sm:$0x11]
        %v481 = vunpack.c.l.bf16 %v479
        %v482 = vunpack.c.h.bf16 %v479
        %v483 = vunpack.c.l.bf16 %v480
        %v484 = vunpack.c.h.bf16 %v480
        %v485 = vld [vmem:[%s3] sm:$0xff]
        %v486 = vld [vmem:[%s3 + $0x8] sm:$0xff]
        %v487 = vld [vmem:[%s3 + $0x10] sm:$0xff]
        %v488 = vld [vmem:[%s4] sm:$0xff]
        %v489 = vld [vmem:[%s4 + $0x8] sm:$0xff]
        %v490 = vld [vmem:[%s4 + $0x10] sm:$0xff]
        %492 = vset.pattern.permute.xlu0 0
        %493 = vperm.xlu0 %492, %v488
        %v494 = vpop.permute.xlu0 %493
        %497 = vset.pattern.permute.xlu0 0
        %498 = vperm.xlu0 %497, %v489
        %v499 = vpop.permute.xlu0 %498
        %502 = vset.pattern.permute.xlu0 0
        %503 = vperm.xlu0 %502, %v490
        %v504 = vpop.permute.xlu0 %503
        %vm506 = vcmask 72704
        %v508 = vsel %vm506, %v485, 0
        %v511 = vsel %vm506, %v486, 0
        %v514 = vsel %vm506, %v487, 0
        %vm516 = vcmask 1040384
        %v518 = vsel %vm516, %v483, 0
        %v521 = vsel %vm516, %v484, 0
        %523 = vmatprep.subr.mxu0 %v482
        %524 = vmatpush1.msra.mxu0 %v481
        %525 = vmatprep.subr.mxu0 %v521
        %526 = vmatpush1.msra.mxu0 %v518
        %527 = vmatprep.subr.mxu0 0.0
        %528 = vmatpush1.msra.mxu0 0.0
        %529 = vmatprep.subr.mxu0 0.0
        %530 = vmatpush1.msra.mxu0 0.0
        %531 = vmatprep.subr.mxu0 0.0
        %532 = vmatpush1.msra.mxu0 0.0
        %533 = vmatprep.subr.mxu0 0.0
        %534 = vmatpush1.msra.mxu0 0.0
        %535 = vmatprep.subr.mxu0 0.0
        %536 = vmatpush1.msra.mxu0 0.0
        %537 = vmatprep.subr.mxu0 0.0
        %538 = vmatpush1.msra.mxu0 0.0
        %539 = vmatprep.subr.mxu0 0.0
        %540 = vmatpush1.msra.mxu0 0.0
        %541 = vmatprep.subr.mxu0 0.0
        %542 = vmatpush1.msra.mxu0 0.0
        %543 = vmatprep.subr.mxu0 0.0
        %544 = vmatpush1.msra.mxu0 0.0
        %545 = vmatprep.subr.mxu0 0.0
        %546 = vmatpush1.msra.mxu0 0.0
        %547 = vmatprep.subr.mxu0 0.0
        %548 = vmatpush1.msra.mxu0 0.0
        %549 = vmatprep.subr.mxu0 0.0
        %550 = vmatpush1.msra.mxu0 0.0
        %551 = vmatprep.subr.mxu0 0.0
        %552 = vmatpush1.msra.mxu0 0.0
        %553 = vmatprep.subr.mxu0 0.0
        %554 = vmatpush1.msra.mxu0 0.0
        %555 = vmatprep.subr.mxu0 0.0
        %556 = vmatpush1.msra.mxu0 0.0
        %557 = vmatprep.subr.mxu0 0.0
        %558 = vmatpush1.msra.mxu0 0.0
        %559 = vmatprep.subr.mxu0 0.0
        %560 = vmatpush1.msra.mxu0 0.0
        %561 = vmatprep.subr.mxu0 0.0
        %562 = vmatpush1.msra.mxu0 0.0
        %563 = vmatprep.subr.mxu0 0.0
        %564 = vmatpush1.msra.mxu0 0.0
        %565 = vmatprep.subr.mxu0 0.0
        %566 = vmatpush1.msra.mxu0 0.0
        %567 = vmatprep.subr.mxu0 0.0
        %568 = vmatpush1.msra.mxu0 0.0
        %569 = vmatprep.subr.mxu0 0.0
        %570 = vmatpush1.msra.mxu0 0.0
        %571 = vmatprep.subr.mxu0 0.0
        %572 = vmatpush1.msra.mxu0 0.0
        %573 = vmatprep.subr.mxu0 0.0
        %574 = vmatpush1.msra.mxu0 0.0
        %575 = vmatprep.subr.mxu0 0.0
        %576 = vmatpush1.msra.mxu0 0.0
        %577 = vmatprep.subr.mxu0 0.0
        %578 = vmatpush1.msra.mxu0 0.0
        %579 = vmatprep.subr.mxu0 0.0
        %580 = vmatpush1.msra.mxu0 0.0
        %581 = vmatprep.subr.mxu0 0.0
        %582 = vmatpush1.msra.mxu0 0.0
        %583 = vmatprep.subr.mxu0 0.0
        %584 = vmatpush1.msra.mxu0 0.0
        %585 = vmatprep.subr.mxu0 0.0
        %586 = vmatpush1.msra.mxu0 0.0
        %587 = vmatprep.mubr.f32.mxu0 0.0
        %588 = vmatmul.mubr.f32.gmra.mrb[0].mxu0 %v508
        %v589 = vpop.f32.mrb[0].mxu0
        %v590 = vadd.f32 %v494, %v589
        %v591 = vpop.f32.mrb[0].mxu0
        %v592 = vadd.f32 %v494, %v591
        %593 = vmatprep.mubr.f32.mxu0 0.0
        %594 = vmatmul.mubr.f32.gmra.mrb[0].mxu0 %v511
        %v595 = vpop.f32.mrb[0].mxu0
        %v596 = vadd.f32 %v499, %v595
        %v597 = vpop.f32.mrb[0].mxu0
        %v598 = vadd.f32 %v499, %v597
        %599 = vmatprep.mubr.f32.mxu0 0.0
        %600 = vmatmul.mubr.f32.gmra.mrb[0].mxu0 %v514
        %v601 = vpop.f32.mrb[0].mxu0
        %v602 = vadd.f32 %v504, %v601
        %v603 = vpop.f32.mrb[0].mxu0
        %v604 = vadd.f32 %v504, %v603
        %605 = vdwg.mxu0
        %v606 = vtanh.pop %v590
        %v607 = vtanh.pop %v592
        %v608 = vtanh.pop %v596
        %v609 = vtanh.pop %v598
        %v610 = vtanh.pop %v602
        %v611 = vtanh.pop %v604
        %v612 = vstv %s475
        %v613 = vmul.f32 %v612, %v606
        %v614 = vmul.f32 %v612, %v607
        %v615 = vmul.f32 %v612, %v608
        %v616 = vmul.f32 %v612, %v609
        %v617 = vstv %s473
        %v618 = vmul.f32 %v617, %v608
        %v619 = vmul.f32 %v617, %v609
        %v620 = vmul.f32 %v617, %v610
        %v621 = vmul.f32 %v617, %v611
        %v622 = vadd.f32 %v613, %v618
        %v623 = vadd.f32 %v614, %v619
        %v624 = vadd.f32 %v615, %v620
        %v625 = vadd.f32 %v616, %v621
        %v626 = vld [vmem:[%s451] sm:$0xff]
        %v627 = vld [vmem:[%s451 + $0x8] sm:$0xff]
        %v628 = vunpack.c.l.bf16 %v626
        %v629 = vunpack.c.h.bf16 %v626
        %v630 = vunpack.c.l.bf16 %v627
        %v631 = vunpack.c.h.bf16 %v627
        %v632 = vmul.f32 %v628, 0.1
        %v633 = vmul.f32 %v629, 0.1
        %v634 = vmul.f32 %v630, 0.1
        %v635 = vmul.f32 %v631, 0.1
        %v636 = vadd.f32 %v622, %v632
        %v637 = vadd.f32 %v623, %v633
        %v638 = vadd.f32 %v624, %v634
        %v639 = vadd.f32 %v625, %v635
        %v640 = vmul.f32 %v624, 0.9
        %v641 = vmul.f32 %v625, 0.9
        %v642 = vsub.f32 %v610, %v640
        %v643 = vsub.f32 %v611, %v641
        %v644 = vstv %s478
        %v645 = vmul.f32 %v642, %v644
        %v646 = vmul.f32 %v643, %v644
        %647 = vst [vmem:[%s471] sm:$0xff] %v645
        %648 = vst [vmem:[%s471 + $0x8] sm:$0xff] %v646
        %v649 = vld [vmem:[%s5] sm:$0xff]
        %v650 = vld [vmem:[%s5 + $0x8] sm:$0xff]
        %v651 = vld [vmem:[%s5 + $0x10] sm:$0xff]
        %v652 = vld [vmem:[%s5 + $0x18] sm:$0xff]
        %v653 = vld [vmem:[%s6] sm:$0xff]
        %v654 = vld [vmem:[%s6 + $0x8] sm:$0xff]
        %v655 = vld [vmem:[%s6 + $0x10] sm:$0xff]
        %v656 = vld [vmem:[%s6 + $0x18] sm:$0xff]
        %658 = vset.pattern.permute.xlu0 0
        %659 = vperm.xlu0 %658, %v653
        %v660 = vpop.permute.xlu0 %659
        %663 = vset.pattern.permute.xlu0 0
        %664 = vperm.xlu0 %663, %v654
        %v665 = vpop.permute.xlu0 %664
        %668 = vset.pattern.permute.xlu0 0
        %669 = vperm.xlu0 %668, %v655
        %v670 = vpop.permute.xlu0 %669
        %673 = vset.pattern.permute.xlu0 0
        %674 = vperm.xlu0 %673, %v656
        %v675 = vpop.permute.xlu0 %674
        %vm677 = vcmask 130048
        %v679 = vsel %vm677, %v649, 0
        %v682 = vsel %vm677, %v650, 0
        %v685 = vsel %vm677, %v651, 0
        %v688 = vsel %vm677, %v652, 0
        %690 = vmatprep.subr.mxu0 %v637
        %691 = vmatpush1.msra.mxu0 %v636
        %692 = vmatprep.subr.mxu0 %v639
        %693 = vmatpush1.msra.mxu0 %v638
        %694 = vmatprep.subr.mxu0 0.0
        %695 = vmatpush1.msra.mxu0 0.0
        %696 = vmatprep.subr.mxu0 0.0
        %697 = vmatpush1.msra.mxu0 0.0
        %698 = vmatprep.subr.mxu0 0.0
        %699 = vmatpush1.msra.mxu0 0.0
        %700 = vmatprep.subr.mxu0 0.0
        %701 = vmatpush1.msra.mxu0 0.0
        %702 = vmatprep.subr.mxu0 0.0
        %703 = vmatpush1.msra.mxu0 0.0
        %704 = vmatprep.subr.mxu0 0.0
        %705 = vmatpush1.msra.mxu0 0.0
        %706 = vmatprep.subr.mxu0 0.0
        %707 = vmatpush1.msra.mxu0 0.0
        %708 = vmatprep.subr.mxu0 0.0
        %709 = vmatpush1.msra.mxu0 0.0
        %710 = vmatprep.subr.mxu0 0.0
        %711 = vmatpush1.msra.mxu0 0.0
        %712 = vmatprep.subr.mxu0 0.0
        %713 = vmatpush1.msra.mxu0 0.0
        %714 = vmatprep.subr.mxu0 0.0
        %715 = vmatpush1.msra.mxu0 0.0
        %716 = vmatprep.subr.mxu0 0.0
        %717 = vmatpush1.msra.mxu0 0.0
        %718 = vmatprep.subr.mxu0 0.0
        %719 = vmatpush1.msra.mxu0 0.0
        %720 = vmatprep.subr.mxu0 0.0
        %721 = vmatpush1.msra.mxu0 0.0
        %722 = vmatprep.subr.mxu0 0.0
        %723 = vmatpush1.msra.mxu0 0.0
        %724 = vmatprep.subr.mxu0 0.0
        %725 = vmatpush1.msra.mxu0 0.0
        %726 = vmatprep.subr.mxu0 0.0
        %727 = vmatpush1.msra.mxu0 0.0
        %728 = vmatprep.subr.mxu0 0.0
        %729 = vmatpush1.msra.mxu0 0.0
        %730 = vmatprep.subr.mxu0 0.0
        %731 = vmatpush1.msra.mxu0 0.0
        %732 = vmatprep.subr.mxu0 0.0
        %733 = vmatpush1.msra.mxu0 0.0
        %734 = vmatprep.subr.mxu0 0.0
        %735 = vmatpush1.msra.mxu0 0.0
        %736 = vmatprep.subr.mxu0 0.0
        %737 = vmatpush1.msra.mxu0 0.0
        %738 = vmatprep.subr.mxu0 0.0
        %739 = vmatpush1.msra.mxu0 0.0
        %740 = vmatprep.subr.mxu0 0.0
        %741 = vmatpush1.msra.mxu0 0.0
        %742 = vmatprep.subr.mxu0 0.0
        %743 = vmatpush1.msra.mxu0 0.0
        %744 = vmatprep.subr.mxu0 0.0
        %745 = vmatpush1.msra.mxu0 0.0
        %746 = vmatprep.subr.mxu0 0.0
        %747 = vmatpush1.msra.mxu0 0.0
        %748 = vmatprep.subr.mxu0 0.0
        %749 = vmatpush1.msra.mxu0 0.0
        %750 = vmatprep.subr.mxu0 0.0
        %751 = vmatpush1.msra.mxu0 0.0
        %752 = vmatprep.subr.mxu0 0.0
        %753 = vmatpush1.msra.mxu0 0.0
        %754 = vmatprep.mubr.f32.mxu0 0.0
        %755 = vmatmul.mubr.f32.gmra.mrb[0].mxu0 %v679
        %v756 = vpop.f32.mrb[0].mxu0
        %v757 = vadd.f32 %v660, %v756
        %v758 = vpop.f32.mrb[0].mxu0
        %v759 = vadd.f32 %v660, %v758
        %760 = vmatprep.mubr.f32.mxu0 0.0
        %761 = vmatmul.mubr.f32.gmra.mrb[0].mxu0 %v682
        %v762 = vpop.f32.mrb[0].mxu0
        %v763 = vadd.f32 %v665, %v762
        %v764 = vpop.f32.mrb[0].mxu0
        %v765 = vadd.f32 %v665, %v764
        %766 = vmatprep.mubr.f32.mxu0 0.0
        %767 = vmatmul.mubr.f32.gmra.mrb[0].mxu0 %v685
        %v768 = vpop.f32.mrb[0].mxu0
        %v769 = vadd.f32 %v670, %v768
        %v770 = vpop.f32.mrb[0].mxu0
        %v771 = vadd.f32 %v670, %v770
        %772 = vmatprep.mubr.f32.mxu0 0.0
        %773 = vmatmul.mubr.f32.gmra.mrb[0].mxu0 %v688
        %v774 = vpop.f32.mrb[0].mxu0
        %v775 = vadd.f32 %v675, %v774
        %v776 = vpop.f32.mrb[0].mxu0
        %v777 = vadd.f32 %v675, %v776
        %778 = vdwg.mxu0
        %v779 = vmul.f32 %v757, %v757
        %v780 = vmul.f32 %v759, %v759
        %v781 = vmul.f32 %v763, %v763
        %v782 = vmul.f32 %v765, %v765
        %v783 = vmul.f32 %v769, %v769
        %v784 = vmul.f32 %v771, %v771
        %v785 = vmul.f32 %v775, %v775
        %v786 = vmul.f32 %v777, %v777
        %v787 = vmul.f32 %v757, %v779
        %v788 = vmul.f32 %v759, %v780
        %v789 = vmul.f32 %v763, %v781
        %v790 = vmul.f32 %v765, %v782
        %v791 = vmul.f32 %v769, %v783
        %v792 = vmul.f32 %v771, %v784
        %v793 = vmul.f32 %v775, %v785
        %v794 = vmul.f32 %v777, %v786
        %v795 = vmul.f32 %v787, 0.044715
        %v796 = vmul.f32 %v788, 0.044715
        %v797 = vmul.f32 %v789, 0.044715
        %v798 = vmul.f32 %v790, 0.044715
        %v799 = vmul.f32 %v791, 0.044715
        %v800 = vmul.f32 %v792, 0.044715
        %v801 = vmul.f32 %v793, 0.044715
        %v802 = vmul.f32 %v794, 0.044715
        %v803 = vadd.f32 %v757, %v795
        %v804 = vadd.f32 %v759, %v796
        %v805 = vadd.f32 %v763, %v797
        %v806 = vadd.f32 %v765, %v798
        %v807 = vadd.f32 %v769, %v799
        %v808 = vadd.f32 %v771, %v800
        %v809 = vadd.f32 %v775, %v801
        %v810 = vadd.f32 %v777, %v802
        %v811 = vmul.f32 %v803, 0.7978846
        %v812 = vmul.f32 %v804, 0.7978846
        %v813 = vmul.f32 %v805, 0.7978846
        %v814 = vmul.f32 %v806, 0.7978846
        %v815 = vmul.f32 %v807, 0.7978846
        %v816 = vmul.f32 %v808, 0.7978846
        %v817 = vmul.f32 %v809, 0.7978846
        %v818 = vmul.f32 %v810, 0.7978846
        %v819 = vtanh.pop %v811
        %v820 = vtanh.pop %v812
        %v821 = vtanh.pop %v813
        %v822 = vtanh.pop %v814
        %v823 = vtanh.pop %v815
        %v824 = vtanh.pop %v816
        %v825 = vtanh.pop %v817
        %v826 = vtanh.pop %v818
        %v827 = vadd.f32 %v819, 1.0
        %v828 = vadd.f32 %v820, 1.0
        %v829 = vadd.f32 %v821, 1.0
        %v830 = vadd.f32 %v822, 1.0
        %v831 = vadd.f32 %v823, 1.0
        %v832 = vadd.f32 %v824, 1.0
        %v833 = vadd.f32 %v825, 1.0
        %v834 = vadd.f32 %v826, 1.0
        %v835 = vmul.f32 %v827, 0.5
        %v836 = vmul.f32 %v828, 0.5
        %v837 = vmul.f32 %v829, 0.5
        %v838 = vmul.f32 %v830, 0.5
        %v839 = vmul.f32 %v831, 0.5
        %v840 = vmul.f32 %v832, 0.5
        %v841 = vmul.f32 %v833, 0.5
        %v842 = vmul.f32 %v834, 0.5
        %v843 = vmul.f32 %v757, %v835
        %v844 = vmul.f32 %v759, %v836
        %v845 = vmul.f32 %v763, %v837
        %v846 = vmul.f32 %v765, %v838
        %v847 = vmul.f32 %v769, %v839
        %v848 = vmul.f32 %v771, %v840
        %v849 = vmul.f32 %v775, %v841
        %v850 = vmul.f32 %v777, %v842
        %v851 = vld [vmem:[%s7] sm:$0xff]
        %v852 = vld [vmem:[%s8] sm:$0xff]
        %854 = vset.pattern.permute.xlu0 0
        %855 = vperm.xlu0 %854, %v852
        %v856 = vpop.permute.xlu0 %855
        %vm858 = vcmask 261120
        %v860 = vsel %vm858, %v851, 0
        %862 = vmatprep.subr.mxu0 %v844
        %863 = vmatpush1.msra.mxu0 %v843
        %864 = vmatprep.subr.mxu0 %v846
        %865 = vmatpush1.msra.mxu0 %v845
        %866 = vmatprep.subr.mxu0 %v848
        %867 = vmatpush1.msra.mxu0 %v847
        %868 = vmatprep.subr.mxu0 %v850
        %869 = vmatpush1.msra.mxu0 %v849
        %870 = vmatprep.subr.mxu0 0.0
        %871 = vmatpush1.msra.mxu0 0.0
        %872 = vmatprep.subr.mxu0 0.0
        %873 = vmatpush1.msra.mxu0 0.0
        %874 = vmatprep.subr.mxu0 0.0
        %875 = vmatpush1.msra.mxu0 0.0
        %876 = vmatprep.subr.mxu0 0.0
        %877 = vmatpush1.msra.mxu0 0.0
        %878 = vmatprep.subr.mxu0 0.0
        %879 = vmatpush1.msra.mxu0 0.0
        %880 = vmatprep.subr.mxu0 0.0
        %881 = vmatpush1.msra.mxu0 0.0
        %882 = vmatprep.subr.mxu0 0.0
        %883 = vmatpush1.msra.mxu0 0.0
        %884 = vmatprep.subr.mxu0 0.0
        %885 = vmatpush1.msra.mxu0 0.0
        %886 = vmatprep.subr.mxu0 0.0
        %887 = vmatpush1.msra.mxu0 0.0
        %888 = vmatprep.subr.mxu0 0.0
        %889 = vmatpush1.msra.mxu0 0.0
        %890 = vmatprep.subr.mxu0 0.0
        %891 = vmatpush1.msra.mxu0 0.0
        %892 = vmatprep.subr.mxu0 0.0
        %893 = vmatpush1.msra.mxu0 0.0
        %894 = vmatprep.subr.mxu0 0.0
        %895 = vmatpush1.msra.mxu0 0.0
        %896 = vmatprep.subr.mxu0 0.0
        %897 = vmatpush1.msra.mxu0 0.0
        %898 = vmatprep.subr.mxu0 0.0
        %899 = vmatpush1.msra.mxu0 0.0
        %900 = vmatprep.subr.mxu0 0.0
        %901 = vmatpush1.msra.mxu0 0.0
        %902 = vmatprep.subr.mxu0 0.0
        %903 = vmatpush1.msra.mxu0 0.0
        %904 = vmatprep.subr.mxu0 0.0
        %905 = vmatpush1.msra.mxu0 0.0
        %906 = vmatprep.subr.mxu0 0.0
        %907 = vmatpush1.msra.mxu0 0.0
        %908 = vmatprep.subr.mxu0 0.0
        %909 = vmatpush1.msra.mxu0 0.0
        %910 = vmatprep.subr.mxu0 0.0
        %911 = vmatpush1.msra.mxu0 0.0
        %912 = vmatprep.subr.mxu0 0.0
        %913 = vmatpush1.msra.mxu0 0.0
        %914 = vmatprep.subr.mxu0 0.0
        %915 = vmatpush1.msra.mxu0 0.0
        %916 = vmatprep.subr.mxu0 0.0
        %917 = vmatpush1.msra.mxu0 0.0
        %918 = vmatprep.subr.mxu0 0.0
        %919 = vmatpush1.msra.mxu0 0.0
        %920 = vmatprep.subr.mxu0 0.0
        %921 = vmatpush1.msra.mxu0 0.0
        %922 = vmatprep.subr.mxu0 0.0
        %923 = vmatpush1.msra.mxu0 0.0
        %924 = vmatprep.subr.mxu0 0.0
        %925 = vmatpush1.msra.mxu0 0.0
        %926 = vmatprep.mubr.f32.mxu0 0.0
        %927 = vmatmul.mubr.f32.gmra.mrb[0].mxu0 %v860
        %v928 = vpop.f32.mrb[0].mxu0
        %v929 = vadd.f32 %v856, %v928
        %v930 = vpop.f32.mrb[0].mxu0
        %v931 = vadd.f32 %v856, %v930
        %932 = vdwg.mxu0
        %933 = vst [vmem:[%s461] sm:$0xff] %v929
        %934 = vst [vmem:[%s461 + $0x8] sm:$0xff] %v931
        %s935 = smul.u32 2, %s28
        %p936 = scmp.lt.s32.totalorder %s27, 1
        %s937 = scalar_select %p936, %s27, 1
        %p938 = scmp.lt.s32.totalorder %s935, 1
        %s939 = scalar_select %p938, %s935, 1
        %s940 = smul.addr %s937, 2
        %s941 = sadd.s32 %s939, %s940
        %s942 = smul.addr %s941, 8
        %s943 = scalar_lea.vmem %s9, %s942
        %s944 = smul.u32 2, %s28
        %p945 = scmp.lt.s32.totalorder %s27, 1
        %s946 = scalar_select %p945, %s27, 1
        %p947 = scmp.lt.s32.totalorder %s944, 1
        %s948 = scalar_select %p947, %s944, 1
        %s949 = smul.addr %s946, 2
        %s950 = sadd.s32 %s948, %s949
        %s951 = smul.addr %s950, 8
        %s952 = scalar_lea.vmem %s10, %s951
        // Predicated region
        $region61: #{model_forward.3} parent=55 // pred_check
          %p953 = pneg %p258
        $region62: #{model_forward.3} parent=55 // pred_check_branch
          %955 = sbr.rel (%p953) target = $region64
        $region63: #{model_forward.3} parent=55 // pred_region
          %s956 = smul.u32 2, %s28
        $region64: #{model_forward.3} parent=55 // pred_fallthru
          _
        // Predicated region
        $region65: #{model_forward.3} parent=55 // pred_check
          %p957 = pneg %p286
        $region66: #{model_forward.3} parent=55 // pred_check_branch
          %959 = sbr.rel (%p957) target = $region68
        $region67: #{model_forward.3} parent=55 // pred_region
          %s960 = smul.u32 2, %s28
        $region68: #{model_forward.3} parent=55 // pred_fallthru
          _
      $region56: #{model_forward.3} parent=5 // pred_fallthru
        _
      %p961 = scmp.le.s32.totalorder 2, %s18
      // Predicated region
      $region69: #{model_forward.3} parent=5 // pred_check
        %p962 = pneg %p961
      $region70: #{model_forward.3} parent=5 // pred_check_branch
        %964 = sbr.rel (%p962) target = $region72
      $region71: #{model_forward.3} parent=5 // pred_region
        %s965 = ssub.s32 %s18, 2
        // Predicated region
        $region73: #{model_forward.3} parent=71 // pred_check
          %p966 = pneg %p264
        $region74: #{model_forward.3} parent=71 // pred_check_branch
          %968 = sbr.rel (%p966) target = $region76
        $region75: #{model_forward.3} parent=71 // pred_region
          %s969 = smul.u32 2, %s30
          %p970 = scmp.lt.s32.totalorder %s29, 1
          %s971 = scalar_select %p970, %s29, 1
          %p972 = scmp.lt.s32.totalorder %s969, 1
          %s973 = scalar_select %p972, %s969, 1
          %s974 = smul.addr %s971, 2
          %s975 = sadd.s32 %s973, %s974
          %s976 = smul.addr %s975, 8
          %s977 = scalar_lea.vmem %s9, %s976
        $region76: #{model_forward.3} parent=71 // pred_fallthru
          _
        // Predicated region
        $region77: #{model_forward.3} parent=71 // pred_check
          %p978 = pneg %p292
        $region78: #{model_forward.3} parent=71 // pred_check_branch
          %980 = sbr.rel (%p978) target = $region80
        $region79: #{model_forward.3} parent=71 // pred_region
          %s981 = smul.u32 2, %s30
          %p982 = scmp.lt.s32.totalorder %s29, 1
          %s983 = scalar_select %p982, %s29, 1
          %p984 = scmp.lt.s32.totalorder %s981, 1
          %s985 = scalar_select %p984, %s981, 1
          %s986 = smul.addr %s983, 2
          %s987 = sadd.s32 %s985, %s986
          %s988 = smul.addr %s987, 8
          %s989 = scalar_lea.vmem %s10, %s988
        $region80: #{model_forward.3} parent=71 // pred_fallthru
          _
      $region72: #{model_forward.3} parent=5 // pred_fallthru
        _
    $region6: #{model_forward.3} parent=1 // loop_footer
      %s22 = sadd.s32 1, %s18
    $region7: #{model_forward.3} parent=1 // loop_footer_branch
      %17 = sbr.rel target = $region3
    $region8: #{model_forward.3} parent=1 // loop_exit
      _
    %990 = vsyncpa [#allocation3], 1
    %s991 = scalar_lea.sflag [#allocation3], 1
    %992 = vsyncpa %s991, 1

</llo_original>
